<compile_context>
chip_gen: v7x
topology: tpu7x:2x2x1
jax: 0.10.0
libtpu: 0.0.40
codegen_flags: <defaults>
</compile_context>

<pallas_src>
import functools

import jax
import jax.numpy as jnp
from jax.experimental import pallas as pl
from jax.experimental.pallas import tpu as pltpu


def _round_up(n, m):
    return ((n + m - 1) // m) * m


def encoder_kernel(x_ref, w1_ref, b1_ref, wh_ref, bh_ref, out_ref):
    # Hidden layer: bf16 MXU matmul, f32 accumulate, f32 bias + ReLU (VPU).
    x = x_ref[...].astype(jnp.bfloat16)
    h = jnp.dot(x, w1_ref[...], preferred_element_type=jnp.float32) + b1_ref[...]
    y = jnp.maximum(h, 0.0).astype(jnp.bfloat16)
    # Fused mu/logvar head: single lane-dense matmul + bias, one unmasked store.
    out_ref[...] = (
        jnp.dot(y, wh_ref[...], preferred_element_type=jnp.float32) + bh_ref[...]
    ).astype(out_ref.dtype)


@functools.partial(jax.jit, static_argnames=("z_dim", "block_b"))
def encoder_forward(x, w1, b1, wh, bh, *, z_dim, block_b=512):
    """x: (B, x_dim) f32.  w1: (x_dim, h_dim) bf16.  b1: (1, h_dim) f32.
    wh: (h_dim, n_pad) bf16 (fused+padded heads).  bh: (1, n_pad) f32."""
    B, x_dim = x.shape
    h_dim = w1.shape[1]
    n_pad = wh.shape[1]

    # Batch tile: multiple of 8 sublanes, capped for VMEM friendliness
    # (block_b=512 keeps double-buffered x/out tiles well under v7x's 64 MiB).
    tb = min(block_b, _round_up(B, 8))
    b_pad = _round_up(B, tb)
    if b_pad != B:
        x = jnp.pad(x, ((0, b_pad - B), (0, 0)))
    grid = (b_pad // tb,)

    out = pl.pallas_call(
        encoder_kernel,
        out_shape=jax.ShapeDtypeStruct((b_pad, n_pad), jnp.float32),
        grid=grid,
        in_specs=[
            pl.BlockSpec((tb, x_dim), lambda i: (i, 0)),       # x: tiled on batch
            pl.BlockSpec((x_dim, h_dim), lambda i: (0, 0)),    # weights stay resident
            pl.BlockSpec((1, h_dim), lambda i: (0, 0)),
            pl.BlockSpec((h_dim, n_pad), lambda i: (0, 0)),
            pl.BlockSpec((1, n_pad), lambda i: (0, 0)),
        ],
        out_specs=pl.BlockSpec((tb, n_pad), lambda i: (i, 0)),
        compiler_params=pltpu.CompilerParams(
            dimension_semantics=("parallel",),  # megacore sharding on v7x
        ),
    )(x, w1, b1, wh, bh)

    # Slice padded, fused output back into (mu, logvar).
    mu = out[:B, :z_dim]
    logvar = out[:B, z_dim:2 * z_dim]
    return mu, logvar


def prepare_params(params, z_dim):
    """Convert per-head f32 params into the fused / padded / bf16 kernel layout."""
    w1 = params["w1"].astype(jnp.bfloat16)
    b1 = params["b1"].astype(jnp.float32)
    wh = jnp.concatenate([params["wmu"], params["wlv"]], axis=1)   # (h_dim, 2*z_dim)
    bh = jnp.concatenate([params["bmu"], params["blv"]], axis=1)   # (1, 2*z_dim)
    n_pad = max(128, _round_up(2 * z_dim, 128))                    # lane-dense output
    pad = n_pad - 2 * z_dim
    wh = jnp.pad(wh, ((0, 0), (0, pad))).astype(jnp.bfloat16)
    bh = jnp.pad(bh, ((0, 0), (0, pad))).astype(jnp.float32)
    return w1, b1, wh, bh


def init_params(key, x_dim, h_dim, z_dim):
    # Deterministic init mimicking nn.Linear's uniform(-1/sqrt(fan_in), 1/sqrt(fan_in)).
    ks = jax.random.split(key, 6)

    def lin(kw, kb, fan_in, fan_out):
        bound = 1.0 / jnp.sqrt(fan_in)
        w = jax.random.uniform(kw, (fan_in, fan_out), jnp.float32, -bound, bound)
        b = jax.random.uniform(kb, (1, fan_out), jnp.float32, -bound, bound)
        return w, b

    w1, b1 = lin(ks[0], ks[1], x_dim, h_dim)
    wmu, bmu = lin(ks[2], ks[3], h_dim, z_dim)
    wlv, blv = lin(ks[4], ks[5], h_dim, z_dim)
    return {"w1": w1, "b1": b1, "wmu": wmu, "bmu": bmu, "wlv": wlv, "blv": blv}


if __name__ == "__main__":
    key = jax.random.PRNGKey(0)
    B, x_dim, h_dim, z_dim = 8, 32, 64, 16
    kx, kp = jax.random.split(key)
    x = jax.random.normal(kx, (B, x_dim), jnp.float32)
    params = init_params(kp, x_dim, h_dim, z_dim)
    w1, b1, wh, bh = prepare_params(params, z_dim)

    mu, logvar = encoder_forward(x, w1, b1, wh, bh, z_dim=z_dim)
    jax.block_until_ready((mu, logvar))

    # Reference replicating the kernel's mixed precision (bf16 operands, f32 acc).
    xb = x.astype(jnp.bfloat16)
    h_ref = jnp.dot(xb, w1, preferred_element_type=jnp.float32) + b1
    y_ref = jnp.maximum(h_ref, 0.0).astype(jnp.bfloat16)
    out_ref = jnp.dot(y_ref, wh, preferred_element_type=jnp.float32) + bh
    mu_ref, lv_ref = out_ref[:, :z_dim], out_ref[:, z_dim:2 * z_dim]
    assert jnp.allclose(mu, mu_ref, atol=1e-3, rtol=1e-3), "mu mismatch (bf16 ref)"
    assert jnp.allclose(logvar, lv_ref, atol=1e-3, rtol=1e-3), "logvar mismatch (bf16 ref)"

    # Loose check against the pure-f32 PyTorch-equivalent math.
    y32 = jnp.maximum(x @ params["w1"] + params["b1"], 0.0)
    mu32 = y32 @ params["wmu"] + params["bmu"]
    lv32 = y32 @ params["wlv"] + params["blv"]
    assert jnp.allclose(mu, mu32, atol=5e-2, rtol=5e-2), "mu mismatch (f32 ref)"
    assert jnp.allclose(logvar, lv32, atol=5e-2, rtol=5e-2), "logvar mismatch (f32 ref)"

    print("KERNEL_OK")
</pallas_src>

<mosaic_0001>
module attributes {stable_mosaic.version = 11 : i64} {
  func.func @encoder_kernel(%arg0: i32, %arg1: memref<8x32xf32, #tpu.memory_space<vmem>>, %arg2: memref<32x64xbf16, #tpu.memory_space<vmem>>, %arg3: memref<1x64xf32, #tpu.memory_space<vmem>>, %arg4: memref<64x128xbf16, #tpu.memory_space<vmem>>, %arg5: memref<1x128xf32, #tpu.memory_space<vmem>>, %arg6: memref<8x128xf32, #tpu.memory_space<vmem>>) attributes {dimension_semantics = [#tpu.dimension_semantics<parallel>], iteration_bounds = array<i64: 1>, scalar_prefetch = 0 : i64, scratch_operands = 0 : i64, tpu.core_type = #tpu.core_type<tc>, window_params = [{transform_indices = @transform_0, window_bounds = array<i64: 8, 32>}, {pipeline_mode = #tpu.pipeline_mode<synchronous>, transform_indices = @transform_1, window_bounds = array<i64: 32, 64>}, {pipeline_mode = #tpu.pipeline_mode<synchronous>, transform_indices = @transform_2, window_bounds = array<i64: 1, 64>}, {pipeline_mode = #tpu.pipeline_mode<synchronous>, transform_indices = @transform_3, window_bounds = array<i64: 64, 128>}, {pipeline_mode = #tpu.pipeline_mode<synchronous>, transform_indices = @transform_4, window_bounds = array<i64: 1, 128>}, {transform_indices = @transform_5, window_bounds = array<i64: 8, 128>}]} {
    %c0 = arith.constant 0 : index
    %c0_0 = arith.constant 0 : index
    %0 = vector.load %arg1[%c0, %c0_0] : memref<8x32xf32, #tpu.memory_space<vmem>>, vector<8x32xf32>
    %1 = arith.truncf %0 : vector<8x32xf32> to vector<8x32xbf16>
    %c0_1 = arith.constant 0 : index
    %c0_2 = arith.constant 0 : index
    %2 = vector.load %arg2[%c0_1, %c0_2] : memref<32x64xbf16, #tpu.memory_space<vmem>>, vector<32x64xbf16>
    %cst = arith.constant dense<0.000000e+00> : vector<8x64xf32>
    %3 = tpu.matmul %1, %2, %cst {dimension_numbers = #tpu.dot_dimension_numbers<[1], [0], [0], [1], [0, 0, 1, 1], [], []>} : vector<8x32xbf16>, vector<32x64xbf16>, vector<8x64xf32> -> vector<8x64xf32>
    %c0_3 = arith.constant 0 : index
    %c0_4 = arith.constant 0 : index
    %4 = vector.load %arg3[%c0_3, %c0_4] : memref<1x64xf32, #tpu.memory_space<vmem>>, vector<1x64xf32>
    %5 = vector.broadcast %4 : vector<1x64xf32> to vector<8x64xf32>
    %6 = arith.addf %3, %5 : vector<8x64xf32>
    %cst_5 = arith.constant 0.000000e+00 : f32
    %7 = vector.broadcast %cst_5 : f32 to vector<8x64xf32>
    %8 = arith.maximumf %6, %7 : vector<8x64xf32>
    %9 = arith.truncf %8 : vector<8x64xf32> to vector<8x64xbf16>
    %c0_6 = arith.constant 0 : index
    %c0_7 = arith.constant 0 : index
    %10 = vector.load %arg4[%c0_6, %c0_7] : memref<64x128xbf16, #tpu.memory_space<vmem>>, vector<64x128xbf16>
    %cst_8 = arith.constant dense<0.000000e+00> : vector<8x128xf32>
    %11 = tpu.matmul %9, %10, %cst_8 {dimension_numbers = #tpu.dot_dimension_numbers<[1], [0], [0], [1], [0, 0, 1, 1], [], []>} : vector<8x64xbf16>, vector<64x128xbf16>, vector<8x128xf32> -> vector<8x128xf32>
    %c0_9 = arith.constant 0 : index
    %c0_10 = arith.constant 0 : index
    %12 = vector.load %arg5[%c0_9, %c0_10] : memref<1x128xf32, #tpu.memory_space<vmem>>, vector<1x128xf32>
    %13 = vector.broadcast %12 : vector<1x128xf32> to vector<8x128xf32>
    %14 = arith.addf %11, %13 : vector<8x128xf32>
    %c0_11 = arith.constant 0 : index
    %c0_12 = arith.constant 0 : index
    %15 = vector.load %arg6[%c0_11, %c0_12] : memref<8x128xf32, #tpu.memory_space<vmem>>, vector<8x128xf32>
    tpu.vector_store %arg6[%c0_11, %c0_12], %14 {strides = array<i32>} : memref<8x128xf32, #tpu.memory_space<vmem>>, vector<8x128xf32>,
    return
  }
  func.func @transform_0(%arg0: i32) -> (i32, i32) {
    %c0_i32 = arith.constant 0 : i32
    %c0_i32_0 = arith.constant 0 : i32
    return %arg0, %c0_i32 : i32, i32
  }
  func.func @transform_1(%arg0: i32) -> (i32, i32) {
    %c0_i32 = arith.constant 0 : i32
    %c0_i32_0 = arith.constant 0 : i32
    %c0_i32_1 = arith.constant 0 : i32
    return %c0_i32, %c0_i32_0 : i32, i32
  }
  func.func @transform_2(%arg0: i32) -> (i32, i32) {
    %c0_i32 = arith.constant 0 : i32
    %c0_i32_0 = arith.constant 0 : i32
    %c0_i32_1 = arith.constant 0 : i32
    return %c0_i32, %c0_i32_0 : i32, i32
  }
  func.func @transform_3(%arg0: i32) -> (i32, i32) {
    %c0_i32 = arith.constant 0 : i32
    %c0_i32_0 = arith.constant 0 : i32
    %c0_i32_1 = arith.constant 0 : i32
    return %c0_i32, %c0_i32_0 : i32, i32
  }
  func.func @transform_4(%arg0: i32) -> (i32, i32) {
    %c0_i32 = arith.constant 0 : i32
    %c0_i32_0 = arith.constant 0 : i32
    %c0_i32_1 = arith.constant 0 : i32
    return %c0_i32, %c0_i32_0 : i32, i32
  }
  func.func @transform_5(%arg0: i32) -> (i32, i32) {
    %c0_i32 = arith.constant 0 : i32
    %c0_i32_0 = arith.constant 0 : i32
    return %arg0, %c0_i32 : i32, i32
  }
}

</mosaic_0001>

<llo_original>
// kernel: encoder_forward.1
$region0: #{encoder_forward.1}
  #allocation0 [shape = 'u32[]', space=smem, size = 0x4, offset = 0x4, fixed_abs, tag = 'smem constant byte address 0x4 - core index']
  #allocation1 [shape = 'u32[144,128]{1,0:T(1,128)}', space=vmem, size = 0x12000, scoped, tag = 'internal scratch']
  %s0 = inlined_call_operand.hbm [shape: f32[8,32], index: 0, kind: input, shape index: {}]
  %s1 = inlined_call_operand.hbm [shape: bf16[32,64], index: 1, kind: input, shape index: {}]
  %s2 = inlined_call_operand.vmem [shape: f32[1,64], index: 2, kind: input, shape index: {}]
  %s3 = inlined_call_operand.hbm [shape: bf16[64,128], index: 3, kind: input, shape index: {}]
  %s4 = inlined_call_operand.vmem [shape: f32[1,128], index: 4, kind: input, shape index: {}]
  %s5 = inlined_call_operand.vmem [shape: f32[8,128], index: 5, kind: output, shape index: {}]
  %s6 = sld [smem:[#allocation0]]
  $region42: #{encoder_forward.1} parent=0
    _
  %s8 = ssub.s32 1, %s6
  %s9 = scalar_select 0, %s8, %s6
  $region1: #{encoder_forward.1} parent=0
    #allocation2 [shape = 'u8[4096]{0}', space=vmem, size = 0x1000, scoped, tag = 'input window, operand 0, single buffered']
    #allocation3 [shape = 's32[1]{0}', space=sflag, size = 0x4, scoped, tag = 'scoped memory for encoder_forward.1']
    #allocation4 [shape = 'u8[8192]{0}', space=vmem, size = 0x2000, scoped, tag = 'input window, operand 1, single buffered']
    #allocation5 [shape = 's32[1]{0}', space=sflag, size = 0x4, scoped, tag = 'scoped memory for encoder_forward.1']
    #allocation6 [shape = 'u8[16384]{0}', space=vmem, size = 0x4000, scoped, tag = 'input window, operand 3, single buffered']
    %10 = vsyncpa [#allocation3], 0
    %11 = vsyncpa [#allocation5], 0
    // Predicated region
    $region2: #{encoder_forward.1} parent=1 // pred_check
      _
    $region3: #{encoder_forward.1} parent=1 // pred_check_branch
      %13 = sbr.rel (0) target = $region5
    $region4: #{encoder_forward.1} parent=1 // pred_region
      %s15 = ssub.s32 128, 128
      %16 = vsyncadd [#allocation3], %s15
      %s18 = sshll.u32 [#allocation2], 4
      %s19 = int_to_ptr.vmem [resolvable:$true] %s18
      %21 = dma.hbm_to_vmem [thread:$0]  %s0, 128, %s19, [#allocation3]
    $region5: #{encoder_forward.1} parent=1 // pred_fallthru
      _
    // Predicated region
    $region6: #{encoder_forward.1} parent=1 // pred_check
      _
    $region7: #{encoder_forward.1} parent=1 // pred_check_branch
      %23 = sbr.rel (0) target = $region9
    $region8: #{encoder_forward.1} parent=1 // pred_region
      %s25 = ssub.s32 256, 256
      %26 = vsyncadd [#allocation5], %s25
      %s27 = sshll.u32 [#allocation4], 4
      %s28 = int_to_ptr.vmem [resolvable:$true] %s27
      %33 = dma.hbm_to_vmem [thread:$0]  %s1, 256, %s28, [#allocation5], 64, 64, 4
    $region9: #{encoder_forward.1} parent=1 // pred_fallthru
      _
    // Predicated region
    $region10: #{encoder_forward.1} parent=1 // pred_check
      _
    $region11: #{encoder_forward.1} parent=1 // pred_check_branch
      %35 = sbr.rel (0) target = $region13
    $region12: #{encoder_forward.1} parent=1 // pred_region
      _
    $region13: #{encoder_forward.1} parent=1 // pred_fallthru
      _
    // Predicated region
    $region14: #{encoder_forward.1} parent=1 // pred_check
      _
    $region15: #{encoder_forward.1} parent=1 // pred_check_branch
      %37 = sbr.rel (0) target = $region17
    $region16: #{encoder_forward.1} parent=1 // pred_region
      %s39 = ssub.s32 512, 512
      %40 = vsyncadd [#allocation5], %s39
      %s41 = sshll.u32 [#allocation6], 4
      %s42 = int_to_ptr.vmem [resolvable:$true] %s41
      %47 = dma.hbm_to_vmem [thread:$0]  %s3, 512, %s42, [#allocation5], 64, 64, 4
    $region17: #{encoder_forward.1} parent=1 // pred_fallthru
      _
    // Predicated region
    $region18: #{encoder_forward.1} parent=1 // pred_check
      _
    $region19: #{encoder_forward.1} parent=1 // pred_check_branch
      %49 = sbr.rel (0) target = $region21
    $region20: #{encoder_forward.1} parent=1 // pred_region
      _
    $region21: #{encoder_forward.1} parent=1 // pred_fallthru
      _
    // Predicated region
    $region22: #{encoder_forward.1} parent=1 // pred_check
      _
    $region23: #{encoder_forward.1} parent=1 // pred_check_branch
      %51 = sbr.rel (0) target = $region25
    $region24: #{encoder_forward.1} parent=1 // pred_region
      %52 = dma.done [#allocation3], 128
    $region25: #{encoder_forward.1} parent=1 // pred_fallthru
      _
    // Predicated region
    $region26: #{encoder_forward.1} parent=1 // pred_check
      _
    $region27: #{encoder_forward.1} parent=1 // pred_check_branch
      %54 = sbr.rel (0) target = $region29
    $region28: #{encoder_forward.1} parent=1 // pred_region
      %55 = dma.done [#allocation5], 256
    $region29: #{encoder_forward.1} parent=1 // pred_fallthru
      _
    // Predicated region
    $region30: #{encoder_forward.1} parent=1 // pred_check
      _
    $region31: #{encoder_forward.1} parent=1 // pred_check_branch
      %57 = sbr.rel (0) target = $region33
    $region32: #{encoder_forward.1} parent=1 // pred_region
      %58 = dma.done [#allocation5], 512
    $region33: #{encoder_forward.1} parent=1 // pred_fallthru
      _
    %v60 = vld [vmem:[#allocation2] sm:$0xff]
    %v61 = vpack.c.bf16 %v60, %v60
    %v62 = vld [vmem:[#allocation4] sm:$0xf]
    %v63 = vld [vmem:[#allocation4 + $0x4] sm:$0xf]
    %v64 = vld [vmem:[#allocation4 + $0x8] sm:$0xf]
    %v65 = vld [vmem:[#allocation4 + $0xc] sm:$0xf]
    %v66 = vld [vmem:[%s2] sm:$0x1]
    %v68 = vlaneseq
    %v69 = vshrl.u32 %v68, 7
    %v70 = vsub.s32 0, %v69
    %v71 = vrot.slane %v66, %v70
    %v77 = vunpack.c.l.b16 %v62
    %v78 = vunpack.c.l.b16 %v63
    %v79 = vunpack.c.l.b16 %v64
    %v80 = vunpack.c.l.b16 %v65
    %v81 = vpack.c.b16 %v78, %v77
    %v82 = vpack.c.b16 %v80, %v79
    %vm85 = vcmask 261120
    %v87 = vsel %vm85, %v61, 0
    %89 = vmatprep.subr.bf16.mxu0 0
    %90 = vmatpush1.bf16.msra.mxu0 %v81
    %91 = vmatprep.subr.bf16.mxu0 0
    %92 = vmatpush1.bf16.msra.mxu0 %v82
    %93 = vmatprep.subr.bf16.mxu0 0
    %94 = vmatpush1.bf16.msra.mxu0 0
    %95 = vmatprep.subr.bf16.mxu0 0
    %96 = vmatpush1.bf16.msra.mxu0 0
    %97 = vmatprep.subr.bf16.mxu0 0
    %98 = vmatpush1.bf16.msra.mxu0 0
    %99 = vmatprep.subr.bf16.mxu0 0
    %100 = vmatpush1.bf16.msra.mxu0 0
    %101 = vmatprep.subr.bf16.mxu0 0
    %102 = vmatpush1.bf16.msra.mxu0 0
    %103 = vmatprep.subr.bf16.mxu0 0
    %104 = vmatpush1.bf16.msra.mxu0 0
    %105 = vmatprep.subr.bf16.mxu0 0
    %106 = vmatpush1.bf16.msra.mxu0 0
    %107 = vmatprep.subr.bf16.mxu0 0
    %108 = vmatpush1.bf16.msra.mxu0 0
    %109 = vmatprep.subr.bf16.mxu0 0
    %110 = vmatpush1.bf16.msra.mxu0 0
    %111 = vmatprep.subr.bf16.mxu0 0
    %112 = vmatpush1.bf16.msra.mxu0 0
    %113 = vmatprep.subr.bf16.mxu0 0
    %114 = vmatpush1.bf16.msra.mxu0 0
    %115 = vmatprep.subr.bf16.mxu0 0
    %116 = vmatpush1.bf16.msra.mxu0 0
    %117 = vmatprep.subr.bf16.mxu0 0
    %118 = vmatpush1.bf16.msra.mxu0 0
    %119 = vmatprep.subr.bf16.mxu0 0
    %120 = vmatpush1.bf16.msra.mxu0 0
    %121 = vmatprep.mubr.bf16.mxu0 0
    %122 = vmatmul.mubr.bf16.gmra.mrb[0].mxu0 %v87
    %v123 = vpop.f32.mrb[0].mxu0
    %v124 = vadd.f32 %v71, %v123
    %v125 = vpop.f32.mrb[0].mxu0
    %v126 = vpop.f32.mrb[0].mxu0
    %v127 = vpop.f32.mrb[0].mxu0
    %128 = vdwg.mxu0
    %v129 = vmax.f32 %v124, 0.0
    %v130 = vpack.c.bf16 %v129, %v129
    %v131 = vld [vmem:[#allocation6] sm:$0xf]
    %v132 = vld [vmem:[#allocation6 + $0x4] sm:$0xf]
    %v133 = vld [vmem:[#allocation6 + $0x8] sm:$0xf]
    %v134 = vld [vmem:[#allocation6 + $0xc] sm:$0xf]
    %v135 = vld [vmem:[#allocation6 + $0x10] sm:$0xf]
    %v136 = vld [vmem:[#allocation6 + $0x14] sm:$0xf]
    %v137 = vld [vmem:[#allocation6 + $0x18] sm:$0xf]
    %v138 = vld [vmem:[#allocation6 + $0x1c] sm:$0xf]
    %v139 = vld [vmem:[%s4] sm:$0x1]
    %v141 = vlaneseq
    %v142 = vshrl.u32 %v141, 7
    %v143 = vsub.s32 0, %v142
    %v144 = vrot.slane %v139, %v143
    %v154 = vunpack.c.l.b16 %v131
    %v155 = vunpack.c.l.b16 %v132
    %v156 = vunpack.c.l.b16 %v133
    %v157 = vunpack.c.l.b16 %v134
    %v158 = vunpack.c.l.b16 %v135
    %v159 = vunpack.c.l.b16 %v136
    %v160 = vunpack.c.l.b16 %v137
    %v161 = vunpack.c.l.b16 %v138
    %v162 = vpack.c.b16 %v155, %v154
    %v163 = vpack.c.b16 %v157, %v156
    %v164 = vpack.c.b16 %v159, %v158
    %v165 = vpack.c.b16 %v161, %v160
    %vm170 = vcmask 523264
    %v172 = vsel %vm170, %v130, 0
    %174 = vmatprep.subr.bf16.mxu0 0
    %175 = vmatpush1.bf16.msra.mxu0 %v162
    %176 = vmatprep.subr.bf16.mxu0 0
    %177 = vmatpush1.bf16.msra.mxu0 %v163
    %178 = vmatprep.subr.bf16.mxu0 0
    %179 = vmatpush1.bf16.msra.mxu0 %v164
    %180 = vmatprep.subr.bf16.mxu0 0
    %181 = vmatpush1.bf16.msra.mxu0 %v165
    %182 = vmatprep.subr.bf16.mxu0 0
    %183 = vmatpush1.bf16.msra.mxu0 0
    %184 = vmatprep.subr.bf16.mxu0 0
    %185 = vmatpush1.bf16.msra.mxu0 0
    %186 = vmatprep.subr.bf16.mxu0 0
    %187 = vmatpush1.bf16.msra.mxu0 0
    %188 = vmatprep.subr.bf16.mxu0 0
    %189 = vmatpush1.bf16.msra.mxu0 0
    %190 = vmatprep.subr.bf16.mxu0 0
    %191 = vmatpush1.bf16.msra.mxu0 0
    %192 = vmatprep.subr.bf16.mxu0 0
    %193 = vmatpush1.bf16.msra.mxu0 0
    %194 = vmatprep.subr.bf16.mxu0 0
    %195 = vmatpush1.bf16.msra.mxu0 0
    %196 = vmatprep.subr.bf16.mxu0 0
    %197 = vmatpush1.bf16.msra.mxu0 0
    %198 = vmatprep.subr.bf16.mxu0 0
    %199 = vmatpush1.bf16.msra.mxu0 0
    %200 = vmatprep.subr.bf16.mxu0 0
    %201 = vmatpush1.bf16.msra.mxu0 0
    %202 = vmatprep.subr.bf16.mxu0 0
    %203 = vmatpush1.bf16.msra.mxu0 0
    %204 = vmatprep.subr.bf16.mxu0 0
    %205 = vmatpush1.bf16.msra.mxu0 0
    %206 = vmatprep.mubr.bf16.mxu0 0
    %207 = vmatmul.mubr.bf16.gmra.mrb[0].mxu0 %v172
    %v208 = vpop.f32.mrb[0].mxu0
    %v209 = vadd.f32 %v144, %v208
    %v210 = vpop.f32.mrb[0].mxu0
    %v211 = vpop.f32.mrb[0].mxu0
    %v212 = vpop.f32.mrb[0].mxu0
    %213 = vdwg.mxu0
    %214 = vst [vmem:[%s5] sm:$0xff] %v209
    // Predicated region
    $region34: #{encoder_forward.1} parent=1 // pred_check
      _
    $region35: #{encoder_forward.1} parent=1 // pred_check_branch
      %216 = sbr.rel (0) target = $region37
    $region36: #{encoder_forward.1} parent=1 // pred_region
      _
    $region37: #{encoder_forward.1} parent=1 // pred_fallthru
      _
    // Predicated region
    $region38: #{encoder_forward.1} parent=1 // pred_check
      _
    $region39: #{encoder_forward.1} parent=1 // pred_check_branch
      %218 = sbr.rel (0) target = $region41
    $region40: #{encoder_forward.1} parent=1 // pred_region
      _
    $region41: #{encoder_forward.1} parent=1 // pred_fallthru
      _
    %219 = vsyncpa [#allocation3], 1
    %220 = vsyncpa [#allocation5], 1

</llo_original>
